<compile_context>
chip_gen: v6e
topology: v6e:2x2x1
jax: 0.10.0
libtpu: 0.0.40
codegen_flags: <defaults>
</compile_context>

<pallas_src>
import functools

import jax
import jax.numpy as jnp
from jax.experimental import pallas as pl
from jax.experimental.pallas import tpu as pltpu


def _csinet_quant_kernel(sigma_ref, centers_ref, x_ref, we_ref, be_ref,
                         wd_ref, bd_ref, out_ref, *, L):
    """Fused encoder -> soft quant -> decoder for one batch tile.

    sigma_ref   : SMEM (1,)        f32   quantizer temperature (scalar prefetch)
    centers_ref : SMEM (L,)        f32   quantizer centers     (scalar prefetch)
    x_ref       : VMEM (TB, F)     f32   flattened NCHW input tile
    we_ref      : VMEM (F, Dp)     bf16  encoder weight (latent zero-padded)
    wd_ref      : VMEM (Dp, F)     bf16  decoder weight (zero-padded rows)
    be_ref/bd_ref : VMEM f32 biases
    out_ref     : VMEM (TB, F)     reconstructed (flattened) output tile
    """
    sigma = sigma_ref[0]

    # ---- encoder: dense bottleneck (MXU, bf16 in / f32 accumulate) ----
    # Cast to bf16 *inside* the kernel: x travels HBM->VMEM as f32 exactly
    # once; a wrapper-side cast would add a whole extra read+write pass.
    x_bf = x_ref[...].astype(jnp.bfloat16)
    h = jnp.dot(x_bf, we_ref[...],
                preferred_element_type=jnp.float32) + be_ref[...]       # (TB, Dp) f32

    # ---- soft quantization (VPU/EUP only, lane-dense (TB, Dp) layout) ----
    # softmax_l(-sigma*(h - c_l)^2) expectation over the centers.  The
    # -sigma*h^2 term is common to every center and cancels in the softmax,
    # so logit_l == a_l*h + b_l with per-center scalars precomputed once per
    # tile on the scalar unit.  Two cheap recompute passes (running max, then
    # exp/accumulate): no per-center intermediates stay live -> no VMEM spills.
    a = [2.0 * sigma * centers_ref[l] for l in range(L)]
    b = [-sigma * centers_ref[l] * centers_ref[l] for l in range(L)]

    m = a[0] * h + b[0]
    for l in range(1, L):
        m = jnp.maximum(m, a[l] * h + b[l])

    num = jnp.zeros_like(h)
    den = jnp.zeros_like(h)
    for l in range(L):
        e = jnp.exp(a[l] * h + b[l] - m)           # EUP, logits - max <= 0
        num = num + e * centers_ref[l]
        den = den + e
    h_q = num * pl.reciprocal(den, approx=True)    # fused softmax expectation

    # ---- decoder: dense + sigmoid (MXU + VPU/EUP) ----
    dec = jnp.dot(h_q.astype(wd_ref.dtype), wd_ref[...],
                  preferred_element_type=jnp.float32) + bd_ref[...]     # (TB, F) f32
    out_ref[...] = jax.nn.sigmoid(dec).astype(out_ref.dtype)


def _ceil_div(a, b):
    return -(-a // b)


def _choose_tiling(B, max_tb=1024):
    """Pick (padded_B, tile_B).

    Big tiles (up to 1024 rows) for pipelining efficiency; batch padded up to a
    tile multiple (no partial-sublane fallback); and whenever the batch allows
    it, an even number of >= 2 grid steps so "parallel" sharding keeps both
    v7x TensorCores busy.
    """
    Bp = _ceil_div(B, 8) * 8                      # sublane-align the batch
    if Bp < 16:
        return Bp, Bp                             # single tiny tile
    n = max(2, _ceil_div(Bp, max_tb))             # >= 2 steps (v7x megacore)
    if n % 2:
        n += 1                                    # even step count across 2 TCs
    tb = _ceil_div(_ceil_div(Bp, n), 8) * 8
    return n * tb, tb


def prepare_params(params):
    """One-time parameter prep (hoisted out of the per-call forward path):
    zero-pad the latent dim to a 128-lane multiple and cast MXU operands to
    bf16.  Padded columns of We / rows of Wd are zero, so the padded latents
    contribute nothing to the decoder output -- exact w.r.t. the result."""
    We, be, Wd, bd = params["We"], params["be"], params["Wd"], params["bd"]
    D = We.shape[1]
    Dp = _ceil_div(D, 128) * 128                  # keep Dp = 128, do NOT pad to 256
    return {
        "We_b": jnp.pad(We, ((0, 0), (0, Dp - D))).astype(jnp.bfloat16),
        "be_p": jnp.pad(be, ((0, 0), (0, Dp - D))),
        "Wd_b": jnp.pad(Wd, ((0, Dp - D), (0, 0))).astype(jnp.bfloat16),
        "bd": bd,
        "centers": params["centers"].reshape(-1),
        "sigma": params["sigma"],
        "Dp": Dp,
        "L": int(params["centers"].shape[-1]),
    }


def csinet_quant_forward(H_in, prep, *, out_dtype=jnp.float32, max_tile_b=1024):
    """H_in: (B, C, H, W) f32 NCHW; prep: output of prepare_params().
    out_dtype=jnp.bfloat16 halves HBM writeback (worth ~1.3-1.5x on the
    HBM-bound v5e/v6e path) if the consumer tolerates bf16."""
    B, C, H, W = H_in.shape
    F_dim = C * H * W
    Dp, L = prep["Dp"], prep["L"]

    x = H_in.reshape(B, F_dim)                    # stays f32; bf16 cast in-kernel

    Bp, tb = _choose_tiling(B, max_tile_b)
    if Bp != B:
        x = jnp.pad(x, ((0, Bp - B), (0, 0)))     # zero rows, sliced off below
    grid = (Bp // tb,)

    out_flat = pl.pallas_call(
        functools.partial(_csinet_quant_kernel, L=L),
        out_shape=jax.ShapeDtypeStruct((Bp, F_dim), out_dtype),
        grid_spec=pltpu.PrefetchScalarGridSpec(
            num_scalar_prefetch=2,                        # sigma, centers -> SMEM
            grid=grid,
            in_specs=[
                pl.BlockSpec((tb, F_dim), lambda i, *_: (i, 0)),   # x tile
                pl.BlockSpec((F_dim, Dp), lambda i, *_: (0, 0)),   # We (resident)
                pl.BlockSpec((1, Dp),     lambda i, *_: (0, 0)),   # be (resident)
                pl.BlockSpec((Dp, F_dim), lambda i, *_: (0, 0)),   # Wd (resident)
                pl.BlockSpec((1, F_dim),  lambda i, *_: (0, 0)),   # bd (resident)
            ],
            out_specs=pl.BlockSpec((tb, F_dim), lambda i, *_: (i, 0)),
        ),
        compiler_params=pltpu.CompilerParams(
            dimension_semantics=("parallel",),            # shards over v7x's 2 TCs
            vmem_limit_bytes=48 * 1024 * 1024),           # room for 1024-row tiles
    )(prep["sigma"], prep["centers"], x,
      prep["We_b"], prep["be_p"], prep["Wd_b"], prep["bd"])

    out = out_flat[:B] if Bp != B else out_flat
    return out.reshape(B, C, H, W)


def csinet_quant_reference(H_in, params):
    """Pure-JAX f32 reference of the same forward pass (correctness check)."""
    B, C, H, W = H_in.shape
    F_dim = C * H * W
    x = H_in.reshape(B, F_dim)
    h_enc = x @ params["We"] + params["be"]                               # (B, D)
    c = params["centers"][0]                                              # (L,)
    logits = -params["sigma"][0] * (h_enc[..., None] - c) ** 2            # (B, D, L)
    q = jax.nn.softmax(logits, axis=-1)
    h_q = jnp.sum(q * c, axis=-1)                                         # (B, D)
    dec = jax.nn.sigmoid(h_q @ params["Wd"] + params["bd"])               # (B, F)
    return dec.reshape(B, C, H, W)


def make_params(key, F_dim, latent_dim, L):
    k_we, k_wd, k_be, k_bd = jax.random.split(key, 4)
    scale_e = 1.0 / jnp.sqrt(F_dim)
    scale_d = 1.0 / jnp.sqrt(latent_dim)
    return {
        "We": jax.random.normal(k_we, (F_dim, latent_dim), jnp.float32) * scale_e,
        "be": jax.random.normal(k_be, (1, latent_dim), jnp.float32) * 0.01,
        "Wd": jax.random.normal(k_wd, (latent_dim, F_dim), jnp.float32) * scale_d,
        "bd": jax.random.normal(k_bd, (1, F_dim), jnp.float32) * 0.01,
        # quantizer: L uniformly spaced centers, soft sigma = 1.0
        "centers": jnp.linspace(-1.0, 1.0, L, dtype=jnp.float32).reshape(1, L),
        "sigma": jnp.array([1.0], dtype=jnp.float32),
    }


if __name__ == "__main__":
    # Small shapes consistent with CsiNet: 2 channels (real/imag), 16x16 CSI,
    # latent_dim = 32, L = 8 quantization centers.
    B, C, H, W = 2, 2, 16, 16
    latent_dim, L = 32, 8
    F_dim = C * H * W

    key = jax.random.PRNGKey(0)
    k_in, k_par = jax.random.split(key)
    H_in = jax.random.uniform(k_in, (B, C, H, W), jnp.float32)
    params = make_params(k_par, F_dim, latent_dim, L)

    prep = prepare_params(params)                 # one-time pad + bf16 cast
    out = jax.block_until_ready(csinet_quant_forward(H_in, prep))
    ref = csinet_quant_reference(H_in, params)

    assert out.shape == (B, C, H, W)
    # bf16 MXU operands + approx reciprocal -> loosened tolerance vs f32 ref.
    assert jnp.allclose(out, ref, atol=2e-2, rtol=2e-2), "mismatch vs reference"

    print("KERNEL_OK")
</pallas_src>

<mosaic_0001>
module attributes {stable_mosaic.version = 11 : i64} {
  func.func @_csinet_quant_kernel(%arg0: i32, %arg1: memref<1xf32, #tpu.memory_space<smem>>, %arg2: memref<8xf32, #tpu.memory_space<smem>>, %arg3: memref<8x512xf32, #tpu.memory_space<vmem>>, %arg4: memref<512x128xbf16, #tpu.memory_space<vmem>>, %arg5: memref<1x128xf32, #tpu.memory_space<vmem>>, %arg6: memref<128x512xbf16, #tpu.memory_space<vmem>>, %arg7: memref<1x512xf32, #tpu.memory_space<vmem>>, %arg8: memref<8x512xf32, #tpu.memory_space<vmem>>) attributes {dimension_semantics = [#tpu.dimension_semantics<parallel>], iteration_bounds = array<i64: 1>, scalar_prefetch = 2 : i64, scratch_operands = 0 : i64, tpu.core_type = #tpu.core_type<tc>, window_params = [{transform_indices = @transform_0, window_bounds = array<i64: 8, 512>}, {pipeline_mode = #tpu.pipeline_mode<synchronous>, transform_indices = @transform_1, window_bounds = array<i64: 512, 128>}, {pipeline_mode = #tpu.pipeline_mode<synchronous>, transform_indices = @transform_2, window_bounds = array<i64: 1, 128>}, {pipeline_mode = #tpu.pipeline_mode<synchronous>, transform_indices = @transform_3, window_bounds = array<i64: 128, 512>}, {pipeline_mode = #tpu.pipeline_mode<synchronous>, transform_indices = @transform_4, window_bounds = array<i64: 1, 512>}, {transform_indices = @transform_5, window_bounds = array<i64: 8, 512>}]} {
    %c0 = arith.constant 0 : index
    %0 = memref.load %arg1[%c0] : memref<1xf32, #tpu.memory_space<smem>>
    %c0_0 = arith.constant 0 : index
    %c0_1 = arith.constant 0 : index
    %1 = vector.load %arg3[%c0_0, %c0_1] : memref<8x512xf32, #tpu.memory_space<vmem>>, vector<8x512xf32>
    %2 = arith.truncf %1 : vector<8x512xf32> to vector<8x512xbf16>
    %c0_2 = arith.constant 0 : index
    %c0_3 = arith.constant 0 : index
    %3 = vector.load %arg4[%c0_2, %c0_3] : memref<512x128xbf16, #tpu.memory_space<vmem>>, vector<512x128xbf16>
    %cst = arith.constant dense<0.000000e+00> : vector<8x128xf32>
    %4 = tpu.matmul %2, %3, %cst {dimension_numbers = #tpu.dot_dimension_numbers<[1], [0], [0], [1], [0, 0, 1, 1], [], []>} : vector<8x512xbf16>, vector<512x128xbf16>, vector<8x128xf32> -> vector<8x128xf32>
    %c0_4 = arith.constant 0 : index
    %c0_5 = arith.constant 0 : index
    %5 = vector.load %arg5[%c0_4, %c0_5] : memref<1x128xf32, #tpu.memory_space<vmem>>, vector<1x128xf32>
    %6 = vector.broadcast %5 : vector<1x128xf32> to vector<8x128xf32>
    %7 = arith.addf %4, %6 : vector<8x128xf32>
    %cst_6 = arith.constant 2.000000e+00 : f32
    %8 = arith.mulf %cst_6, %0 : f32
    %c0_7 = arith.constant 0 : index
    %9 = memref.load %arg2[%c0_7] : memref<8xf32, #tpu.memory_space<smem>>
    %10 = arith.mulf %8, %9 : f32
    %cst_8 = arith.constant 2.000000e+00 : f32
    %11 = arith.mulf %cst_8, %0 : f32
    %c1 = arith.constant 1 : index
    %12 = memref.load %arg2[%c1] : memref<8xf32, #tpu.memory_space<smem>>
    %13 = arith.mulf %11, %12 : f32
    %cst_9 = arith.constant 2.000000e+00 : f32
    %14 = arith.mulf %cst_9, %0 : f32
    %c2 = arith.constant 2 : index
    %15 = memref.load %arg2[%c2] : memref<8xf32, #tpu.memory_space<smem>>
    %16 = arith.mulf %14, %15 : f32
    %cst_10 = arith.constant 2.000000e+00 : f32
    %17 = arith.mulf %cst_10, %0 : f32
    %c3 = arith.constant 3 : index
    %18 = memref.load %arg2[%c3] : memref<8xf32, #tpu.memory_space<smem>>
    %19 = arith.mulf %17, %18 : f32
    %cst_11 = arith.constant 2.000000e+00 : f32
    %20 = arith.mulf %cst_11, %0 : f32
    %c4 = arith.constant 4 : index
    %21 = memref.load %arg2[%c4] : memref<8xf32, #tpu.memory_space<smem>>
    %22 = arith.mulf %20, %21 : f32
    %cst_12 = arith.constant 2.000000e+00 : f32
    %23 = arith.mulf %cst_12, %0 : f32
    %c5 = arith.constant 5 : index
    %24 = memref.load %arg2[%c5] : memref<8xf32, #tpu.memory_space<smem>>
    %25 = arith.mulf %23, %24 : f32
    %cst_13 = arith.constant 2.000000e+00 : f32
    %26 = arith.mulf %cst_13, %0 : f32
    %c6 = arith.constant 6 : index
    %27 = memref.load %arg2[%c6] : memref<8xf32, #tpu.memory_space<smem>>
    %28 = arith.mulf %26, %27 : f32
    %cst_14 = arith.constant 2.000000e+00 : f32
    %29 = arith.mulf %cst_14, %0 : f32
    %c7 = arith.constant 7 : index
    %30 = memref.load %arg2[%c7] : memref<8xf32, #tpu.memory_space<smem>>
    %31 = arith.mulf %29, %30 : f32
    %cst_15 = arith.constant 0.000000e+00 : f32
    %32 = arith.subf %cst_15, %0 : f32
    %c0_16 = arith.constant 0 : index
    %33 = memref.load %arg2[%c0_16] : memref<8xf32, #tpu.memory_space<smem>>
    %34 = arith.mulf %32, %33 : f32
    %c0_17 = arith.constant 0 : index
    %35 = memref.load %arg2[%c0_17] : memref<8xf32, #tpu.memory_space<smem>>
    %36 = arith.mulf %34, %35 : f32
    %cst_18 = arith.constant 0.000000e+00 : f32
    %37 = arith.subf %cst_18, %0 : f32
    %c1_19 = arith.constant 1 : index
    %38 = memref.load %arg2[%c1_19] : memref<8xf32, #tpu.memory_space<smem>>
    %39 = arith.mulf %37, %38 : f32
    %c1_20 = arith.constant 1 : index
    %40 = memref.load %arg2[%c1_20] : memref<8xf32, #tpu.memory_space<smem>>
    %41 = arith.mulf %39, %40 : f32
    %cst_21 = arith.constant 0.000000e+00 : f32
    %42 = arith.subf %cst_21, %0 : f32
    %c2_22 = arith.constant 2 : index
    %43 = memref.load %arg2[%c2_22] : memref<8xf32, #tpu.memory_space<smem>>
    %44 = arith.mulf %42, %43 : f32
    %c2_23 = arith.constant 2 : index
    %45 = memref.load %arg2[%c2_23] : memref<8xf32, #tpu.memory_space<smem>>
    %46 = arith.mulf %44, %45 : f32
    %cst_24 = arith.constant 0.000000e+00 : f32
    %47 = arith.subf %cst_24, %0 : f32
    %c3_25 = arith.constant 3 : index
    %48 = memref.load %arg2[%c3_25] : memref<8xf32, #tpu.memory_space<smem>>
    %49 = arith.mulf %47, %48 : f32
    %c3_26 = arith.constant 3 : index
    %50 = memref.load %arg2[%c3_26] : memref<8xf32, #tpu.memory_space<smem>>
    %51 = arith.mulf %49, %50 : f32
    %cst_27 = arith.constant 0.000000e+00 : f32
    %52 = arith.subf %cst_27, %0 : f32
    %c4_28 = arith.constant 4 : index
    %53 = memref.load %arg2[%c4_28] : memref<8xf32, #tpu.memory_space<smem>>
    %54 = arith.mulf %52, %53 : f32
    %c4_29 = arith.constant 4 : index
    %55 = memref.load %arg2[%c4_29] : memref<8xf32, #tpu.memory_space<smem>>
    %56 = arith.mulf %54, %55 : f32
    %cst_30 = arith.constant 0.000000e+00 : f32
    %57 = arith.subf %cst_30, %0 : f32
    %c5_31 = arith.constant 5 : index
    %58 = memref.load %arg2[%c5_31] : memref<8xf32, #tpu.memory_space<smem>>
    %59 = arith.mulf %57, %58 : f32
    %c5_32 = arith.constant 5 : index
    %60 = memref.load %arg2[%c5_32] : memref<8xf32, #tpu.memory_space<smem>>
    %61 = arith.mulf %59, %60 : f32
    %cst_33 = arith.constant 0.000000e+00 : f32
    %62 = arith.subf %cst_33, %0 : f32
    %c6_34 = arith.constant 6 : index
    %63 = memref.load %arg2[%c6_34] : memref<8xf32, #tpu.memory_space<smem>>
    %64 = arith.mulf %62, %63 : f32
    %c6_35 = arith.constant 6 : index
    %65 = memref.load %arg2[%c6_35] : memref<8xf32, #tpu.memory_space<smem>>
    %66 = arith.mulf %64, %65 : f32
    %cst_36 = arith.constant 0.000000e+00 : f32
    %67 = arith.subf %cst_36, %0 : f32
    %c7_37 = arith.constant 7 : index
    %68 = memref.load %arg2[%c7_37] : memref<8xf32, #tpu.memory_space<smem>>
    %69 = arith.mulf %67, %68 : f32
    %c7_38 = arith.constant 7 : index
    %70 = memref.load %arg2[%c7_38] : memref<8xf32, #tpu.memory_space<smem>>
    %71 = arith.mulf %69, %70 : f32
    %72 = vector.broadcast %10 : f32 to vector<8x128xf32>
    %73 = arith.mulf %72, %7 : vector<8x128xf32>
    %74 = vector.broadcast %36 : f32 to vector<8x128xf32>
    %75 = arith.addf %73, %74 : vector<8x128xf32>
    %76 = vector.broadcast %13 : f32 to vector<8x128xf32>
    %77 = arith.mulf %76, %7 : vector<8x128xf32>
    %78 = vector.broadcast %41 : f32 to vector<8x128xf32>
    %79 = arith.addf %77, %78 : vector<8x128xf32>
    %80 = arith.maximumf %75, %79 : vector<8x128xf32>
    %81 = vector.broadcast %16 : f32 to vector<8x128xf32>
    %82 = arith.mulf %81, %7 : vector<8x128xf32>
    %83 = vector.broadcast %46 : f32 to vector<8x128xf32>
    %84 = arith.addf %82, %83 : vector<8x128xf32>
    %85 = arith.maximumf %80, %84 : vector<8x128xf32>
    %86 = vector.broadcast %19 : f32 to vector<8x128xf32>
    %87 = arith.mulf %86, %7 : vector<8x128xf32>
    %88 = vector.broadcast %51 : f32 to vector<8x128xf32>
    %89 = arith.addf %87, %88 : vector<8x128xf32>
    %90 = arith.maximumf %85, %89 : vector<8x128xf32>
    %91 = vector.broadcast %22 : f32 to vector<8x128xf32>
    %92 = arith.mulf %91, %7 : vector<8x128xf32>
    %93 = vector.broadcast %56 : f32 to vector<8x128xf32>
    %94 = arith.addf %92, %93 : vector<8x128xf32>
    %95 = arith.maximumf %90, %94 : vector<8x128xf32>
    %96 = vector.broadcast %25 : f32 to vector<8x128xf32>
    %97 = arith.mulf %96, %7 : vector<8x128xf32>
    %98 = vector.broadcast %61 : f32 to vector<8x128xf32>
    %99 = arith.addf %97, %98 : vector<8x128xf32>
    %100 = arith.maximumf %95, %99 : vector<8x128xf32>
    %101 = vector.broadcast %28 : f32 to vector<8x128xf32>
    %102 = arith.mulf %101, %7 : vector<8x128xf32>
    %103 = vector.broadcast %66 : f32 to vector<8x128xf32>
    %104 = arith.addf %102, %103 : vector<8x128xf32>
    %105 = arith.maximumf %100, %104 : vector<8x128xf32>
    %106 = vector.broadcast %31 : f32 to vector<8x128xf32>
    %107 = arith.mulf %106, %7 : vector<8x128xf32>
    %108 = vector.broadcast %71 : f32 to vector<8x128xf32>
    %109 = arith.addf %107, %108 : vector<8x128xf32>
    %110 = arith.maximumf %105, %109 : vector<8x128xf32>
    %cst_39 = arith.constant 0.000000e+00 : f32
    %111 = vector.broadcast %cst_39 : f32 to vector<8x128xf32>
    %cst_40 = arith.constant 0.000000e+00 : f32
    %112 = vector.broadcast %cst_40 : f32 to vector<8x128xf32>
    %113 = vector.broadcast %10 : f32 to vector<8x128xf32>
    %114 = arith.mulf %113, %7 : vector<8x128xf32>
    %115 = vector.broadcast %36 : f32 to vector<8x128xf32>
    %116 = arith.addf %114, %115 : vector<8x128xf32>
    %117 = arith.subf %116, %110 : vector<8x128xf32>
    %118 = math.exp %117 : vector<8x128xf32>
    %c0_41 = arith.constant 0 : index
    %119 = memref.load %arg2[%c0_41] : memref<8xf32, #tpu.memory_space<smem>>
    %120 = vector.broadcast %119 : f32 to vector<8x128xf32>
    %121 = arith.mulf %118, %120 : vector<8x128xf32>
    %122 = arith.addf %111, %121 : vector<8x128xf32>
    %123 = arith.addf %112, %118 : vector<8x128xf32>
    %124 = vector.broadcast %13 : f32 to vector<8x128xf32>
    %125 = arith.mulf %124, %7 : vector<8x128xf32>
    %126 = vector.broadcast %41 : f32 to vector<8x128xf32>
    %127 = arith.addf %125, %126 : vector<8x128xf32>
    %128 = arith.subf %127, %110 : vector<8x128xf32>
    %129 = math.exp %128 : vector<8x128xf32>
    %c1_42 = arith.constant 1 : index
    %130 = memref.load %arg2[%c1_42] : memref<8xf32, #tpu.memory_space<smem>>
    %131 = vector.broadcast %130 : f32 to vector<8x128xf32>
    %132 = arith.mulf %129, %131 : vector<8x128xf32>
    %133 = arith.addf %122, %132 : vector<8x128xf32>
    %134 = arith.addf %123, %129 : vector<8x128xf32>
    %135 = vector.broadcast %16 : f32 to vector<8x128xf32>
    %136 = arith.mulf %135, %7 : vector<8x128xf32>
    %137 = vector.broadcast %46 : f32 to vector<8x128xf32>
    %138 = arith.addf %136, %137 : vector<8x128xf32>
    %139 = arith.subf %138, %110 : vector<8x128xf32>
    %140 = math.exp %139 : vector<8x128xf32>
    %c2_43 = arith.constant 2 : index
    %141 = memref.load %arg2[%c2_43] : memref<8xf32, #tpu.memory_space<smem>>
    %142 = vector.broadcast %141 : f32 to vector<8x128xf32>
    %143 = arith.mulf %140, %142 : vector<8x128xf32>
    %144 = arith.addf %133, %143 : vector<8x128xf32>
    %145 = arith.addf %134, %140 : vector<8x128xf32>
    %146 = vector.broadcast %19 : f32 to vector<8x128xf32>
    %147 = arith.mulf %146, %7 : vector<8x128xf32>
    %148 = vector.broadcast %51 : f32 to vector<8x128xf32>
    %149 = arith.addf %147, %148 : vector<8x128xf32>
    %150 = arith.subf %149, %110 : vector<8x128xf32>
    %151 = math.exp %150 : vector<8x128xf32>
    %c3_44 = arith.constant 3 : index
    %152 = memref.load %arg2[%c3_44] : memref<8xf32, #tpu.memory_space<smem>>
    %153 = vector.broadcast %152 : f32 to vector<8x128xf32>
    %154 = arith.mulf %151, %153 : vector<8x128xf32>
    %155 = arith.addf %144, %154 : vector<8x128xf32>
    %156 = arith.addf %145, %151 : vector<8x128xf32>
    %157 = vector.broadcast %22 : f32 to vector<8x128xf32>
    %158 = arith.mulf %157, %7 : vector<8x128xf32>
    %159 = vector.broadcast %56 : f32 to vector<8x128xf32>
    %160 = arith.addf %158, %159 : vector<8x128xf32>
    %161 = arith.subf %160, %110 : vector<8x128xf32>
    %162 = math.exp %161 : vector<8x128xf32>
    %c4_45 = arith.constant 4 : index
    %163 = memref.load %arg2[%c4_45] : memref<8xf32, #tpu.memory_space<smem>>
    %164 = vector.broadcast %163 : f32 to vector<8x128xf32>
    %165 = arith.mulf %162, %164 : vector<8x128xf32>
    %166 = arith.addf %155, %165 : vector<8x128xf32>
    %167 = arith.addf %156, %162 : vector<8x128xf32>
    %168 = vector.broadcast %25 : f32 to vector<8x128xf32>
    %169 = arith.mulf %168, %7 : vector<8x128xf32>
    %170 = vector.broadcast %61 : f32 to vector<8x128xf32>
    %171 = arith.addf %169, %170 : vector<8x128xf32>
    %172 = arith.subf %171, %110 : vector<8x128xf32>
    %173 = math.exp %172 : vector<8x128xf32>
    %c5_46 = arith.constant 5 : index
    %174 = memref.load %arg2[%c5_46] : memref<8xf32, #tpu.memory_space<smem>>
    %175 = vector.broadcast %174 : f32 to vector<8x128xf32>
    %176 = arith.mulf %173, %175 : vector<8x128xf32>
    %177 = arith.addf %166, %176 : vector<8x128xf32>
    %178 = arith.addf %167, %173 : vector<8x128xf32>
    %179 = vector.broadcast %28 : f32 to vector<8x128xf32>
    %180 = arith.mulf %179, %7 : vector<8x128xf32>
    %181 = vector.broadcast %66 : f32 to vector<8x128xf32>
    %182 = arith.addf %180, %181 : vector<8x128xf32>
    %183 = arith.subf %182, %110 : vector<8x128xf32>
    %184 = math.exp %183 : vector<8x128xf32>
    %c6_47 = arith.constant 6 : index
    %185 = memref.load %arg2[%c6_47] : memref<8xf32, #tpu.memory_space<smem>>
    %186 = vector.broadcast %185 : f32 to vector<8x128xf32>
    %187 = arith.mulf %184, %186 : vector<8x128xf32>
    %188 = arith.addf %177, %187 : vector<8x128xf32>
    %189 = arith.addf %178, %184 : vector<8x128xf32>
    %190 = vector.broadcast %31 : f32 to vector<8x128xf32>
    %191 = arith.mulf %190, %7 : vector<8x128xf32>
    %192 = vector.broadcast %71 : f32 to vector<8x128xf32>
    %193 = arith.addf %191, %192 : vector<8x128xf32>
    %194 = arith.subf %193, %110 : vector<8x128xf32>
    %195 = math.exp %194 : vector<8x128xf32>
    %c7_48 = arith.constant 7 : index
    %196 = memref.load %arg2[%c7_48] : memref<8xf32, #tpu.memory_space<smem>>
    %197 = vector.broadcast %196 : f32 to vector<8x128xf32>
    %198 = arith.mulf %195, %197 : vector<8x128xf32>
    %199 = arith.addf %188, %198 : vector<8x128xf32>
    %200 = arith.addf %189, %195 : vector<8x128xf32>
    %201 = tpu.reciprocal %200 {approx = true} : vector<8x128xf32> -> vector<8x128xf32>
    %202 = arith.mulf %199, %201 : vector<8x128xf32>
    %203 = arith.truncf %202 : vector<8x128xf32> to vector<8x128xbf16>
    %c0_49 = arith.constant 0 : index
    %c0_50 = arith.constant 0 : index
    %204 = vector.load %arg6[%c0_49, %c0_50] : memref<128x512xbf16, #tpu.memory_space<vmem>>, vector<128x512xbf16>
    %cst_51 = arith.constant dense<0.000000e+00> : vector<8x512xf32>
    %205 = tpu.matmul %203, %204, %cst_51 {dimension_numbers = #tpu.dot_dimension_numbers<[1], [0], [0], [1], [0, 0, 1, 1], [], []>} : vector<8x128xbf16>, vector<128x512xbf16>, vector<8x512xf32> -> vector<8x512xf32>
    %c0_52 = arith.constant 0 : index
    %c0_53 = arith.constant 0 : index
    %206 = vector.load %arg7[%c0_52, %c0_53] : memref<1x512xf32, #tpu.memory_space<vmem>>, vector<1x512xf32>
    %207 = vector.broadcast %206 : vector<1x512xf32> to vector<8x512xf32>
    %208 = arith.addf %205, %207 : vector<8x512xf32>
    %209 = arith.negf %208 : vector<8x512xf32>
    %210 = math.exp %209 : vector<8x512xf32>
    %cst_54 = arith.constant 1.000000e+00 : f32
    %211 = vector.broadcast %cst_54 : f32 to vector<8x512xf32>
    %212 = arith.addf %211, %210 : vector<8x512xf32>
    %213 = arith.divf %211, %212 : vector<8x512xf32>
    %c0_55 = arith.constant 0 : index
    %c0_56 = arith.constant 0 : index
    %214 = vector.load %arg8[%c0_55, %c0_56] : memref<8x512xf32, #tpu.memory_space<vmem>>, vector<8x512xf32>
    tpu.vector_store %arg8[%c0_55, %c0_56], %213 {strides = array<i32>} : memref<8x512xf32, #tpu.memory_space<vmem>>, vector<8x512xf32>,
    return
  }
  func.func @transform_0(%arg0: i32, %arg1: memref<1xf32, #tpu.memory_space<smem>>, %arg2: memref<8xf32, #tpu.memory_space<smem>>) -> (i32, i32) {
    %c0_i32 = arith.constant 0 : i32
    %c0_i32_0 = arith.constant 0 : i32
    return %arg0, %c0_i32 : i32, i32
  }
  func.func @transform_1(%arg0: i32, %arg1: memref<1xf32, #tpu.memory_space<smem>>, %arg2: memref<8xf32, #tpu.memory_space<smem>>) -> (i32, i32) {
    %c0_i32 = arith.constant 0 : i32
    %c0_i32_0 = arith.constant 0 : i32
    %c0_i32_1 = arith.constant 0 : i32
    return %c0_i32, %c0_i32_0 : i32, i32
  }
  func.func @transform_2(%arg0: i32, %arg1: memref<1xf32, #tpu.memory_space<smem>>, %arg2: memref<8xf32, #tpu.memory_space<smem>>) -> (i32, i32) {
    %c0_i32 = arith.constant 0 : i32
    %c0_i32_0 = arith.constant 0 : i32
    %c0_i32_1 = arith.constant 0 : i32
    return %c0_i32, %c0_i32_0 : i32, i32
  }
  func.func @transform_3(%arg0: i32, %arg1: memref<1xf32, #tpu.memory_space<smem>>, %arg2: memref<8xf32, #tpu.memory_space<smem>>) -> (i32, i32) {
    %c0_i32 = arith.constant 0 : i32
    %c0_i32_0 = arith.constant 0 : i32
    %c0_i32_1 = arith.constant 0 : i32
    return %c0_i32, %c0_i32_0 : i32, i32
  }
  func.func @transform_4(%arg0: i32, %arg1: memref<1xf32, #tpu.memory_space<smem>>, %arg2: memref<8xf32, #tpu.memory_space<smem>>) -> (i32, i32) {
    %c0_i32 = arith.constant 0 : i32
    %c0_i32_0 = arith.constant 0 : i32
    %c0_i32_1 = arith.constant 0 : i32
    return %c0_i32, %c0_i32_0 : i32, i32
  }
  func.func @transform_5(%arg0: i32, %arg1: memref<1xf32, #tpu.memory_space<smem>>, %arg2: memref<8xf32, #tpu.memory_space<smem>>) -> (i32, i32) {
    %c0_i32 = arith.constant 0 : i32
    %c0_i32_0 = arith.constant 0 : i32
    return %arg0, %c0_i32 : i32, i32
  }
}

</mosaic_0001>

<llo_original>
// kernel: tpu_custom_call.1
$region0: #{tpu_custom_call.1}
  #allocation0 [shape = 'u32[]', space=smem, size = 0x4, offset = 0x4, fixed_abs, tag = 'smem constant byte address 0x4 - core index']
  #allocation1 [shape = 'u32[144,128]{1,0:T(1,128)}', space=vmem, size = 0x12000, scoped, tag = 'internal scratch']
  #allocation2 [shape = 's32[1]{0}', space=sflag, size = 0x4, scoped, tag = 'scoped memory for tpu_custom_call.1']
  #allocation3 [shape = 'f32[1]{0:T(128)S(6)}', space=smem, size = 0x200, scoped, tag = 'prefetched SMEM operand 0']
  #allocation4 [shape = 'u8[512]{0}', space=smem, size = 0x200, scoped, tag = 'prefetched SMEM operand 1']
  %s0 = inlined_call_operand.<no memory space> [shape: f32[1], index: 0, kind: input, shape index: {}]
  %s1 = inlined_call_operand.vmem [shape: f32[8], index: 1, kind: input, shape index: {}]
  %s2 = inlined_call_operand.hbm [shape: f32[8,512], index: 2, kind: input, shape index: {}]
  %s3 = inlined_call_operand.hbm [shape: bf16[512,128], index: 3, kind: input, shape index: {}]
  %s4 = inlined_call_operand.vmem [shape: f32[1,128], index: 4, kind: input, shape index: {}]
  %s5 = inlined_call_operand.hbm [shape: bf16[128,512], index: 5, kind: input, shape index: {}]
  %s6 = inlined_call_operand.vmem [shape: f32[1,512], index: 6, kind: input, shape index: {}]
  %s7 = inlined_call_operand.hbm [shape: f32[8,512], index: 7, kind: output, shape index: {}]
  %s8 = sld [smem:[#allocation0]]
  $region42: #{tpu_custom_call.1} parent=0
    _
  %s10 = ssub.s32 1, %s8
  %s11 = scalar_select 0, %s10, %s8
  %12 = sst [smem:[#allocation3]] %s0
  %s13 = sshll.u32 %s1, 4
  %s14 = int_to_ptr.vmem [resolvable:$true] %s13
  %16 = dma.vmem_to_smem %s14, 16, [#allocation4], [#allocation2]
  %17 = dma.done [#allocation2], 16
  %18 = sfence
  $region1: #{tpu_custom_call.1} parent=0
    #allocation5 [shape = 'u8[16384]{0}', space=vmem, size = 0x4000, scoped, tag = 'input window, operand 2, single buffered']
    #allocation6 [shape = 's32[1]{0}', space=sflag, size = 0x4, scoped, tag = 'scoped memory for tpu_custom_call.1']
    #allocation7 [shape = 's32[1]{0}', space=sflag, size = 0x4, scoped, tag = 'scoped memory for tpu_custom_call.1']
    #allocation8 [shape = 'u8[131072]{0}', space=vmem, size = 0x20000, scoped, tag = 'input window, operand 3, single buffered']
    #allocation9 [shape = 's32[1]{0}', space=sflag, size = 0x4, scoped, tag = 'scoped memory for tpu_custom_call.1']
    #allocation10 [shape = 'u8[131072]{0}', space=vmem, size = 0x20000, scoped, tag = 'input window, operand 5, single buffered']
    #allocation11 [shape = 'u8[16384]{0}', space=vmem, size = 0x4000, scoped, tag = 'output window, operand 0, single buffered']
    %19 = vsyncpa [#allocation6], 0
    %20 = vsyncpa [#allocation9], 0
    %21 = vsyncpa [#allocation7], 0
    // Predicated region
    $region2: #{tpu_custom_call.1} parent=1 // pred_check
      _
    $region3: #{tpu_custom_call.1} parent=1 // pred_check_branch
      %23 = sbr.rel (0) target = $region5
    $region4: #{tpu_custom_call.1} parent=1 // pred_region
      %s25 = ssub.s32 512, 512
      %26 = vsyncadd [#allocation6], %s25
      %s28 = sshll.u32 [#allocation5], 4
      %s29 = int_to_ptr.vmem [resolvable:$true] %s28
      %31 = dma.hbm_to_vmem [thread:$0]  %s2, 512, %s29, [#allocation6]
    $region5: #{tpu_custom_call.1} parent=1 // pred_fallthru
      _
    // Predicated region
    $region6: #{tpu_custom_call.1} parent=1 // pred_check
      _
    $region7: #{tpu_custom_call.1} parent=1 // pred_check_branch
      %33 = sbr.rel (0) target = $region9
    $region8: #{tpu_custom_call.1} parent=1 // pred_region
      %s35 = ssub.s32 4096, 4096
      %36 = vsyncadd [#allocation9], %s35
      %s37 = sshll.u32 [#allocation8], 4
      %s38 = int_to_ptr.vmem [resolvable:$true] %s37
      %43 = dma.hbm_to_vmem [thread:$0]  %s3, 4096, %s38, [#allocation9], 64, 64, 4
    $region9: #{tpu_custom_call.1} parent=1 // pred_fallthru
      _
    // Predicated region
    $region10: #{tpu_custom_call.1} parent=1 // pred_check
      _
    $region11: #{tpu_custom_call.1} parent=1 // pred_check_branch
      %45 = sbr.rel (0) target = $region13
    $region12: #{tpu_custom_call.1} parent=1 // pred_region
      _
    $region13: #{tpu_custom_call.1} parent=1 // pred_fallthru
      _
    // Predicated region
    $region14: #{tpu_custom_call.1} parent=1 // pred_check
      _
    $region15: #{tpu_custom_call.1} parent=1 // pred_check_branch
      %47 = sbr.rel (0) target = $region17
    $region16: #{tpu_custom_call.1} parent=1 // pred_region
      %s49 = ssub.s32 4096, 4096
      %50 = vsyncadd [#allocation9], %s49
      %s51 = sshll.u32 [#allocation10], 4
      %s52 = int_to_ptr.vmem [resolvable:$true] %s51
      %57 = dma.hbm_to_vmem [thread:$0]  %s5, 4096, %s52, [#allocation9], 256, 256, 16
    $region17: #{tpu_custom_call.1} parent=1 // pred_fallthru
      _
    // Predicated region
    $region18: #{tpu_custom_call.1} parent=1 // pred_check
      _
    $region19: #{tpu_custom_call.1} parent=1 // pred_check_branch
      %59 = sbr.rel (0) target = $region21
    $region20: #{tpu_custom_call.1} parent=1 // pred_region
      _
    $region21: #{tpu_custom_call.1} parent=1 // pred_fallthru
      _
    // Predicated region
    $region22: #{tpu_custom_call.1} parent=1 // pred_check
      _
    $region23: #{tpu_custom_call.1} parent=1 // pred_check_branch
      %61 = sbr.rel (0) target = $region25
    $region24: #{tpu_custom_call.1} parent=1 // pred_region
      %62 = dma.done [#allocation6], 512
    $region25: #{tpu_custom_call.1} parent=1 // pred_fallthru
      _
    // Predicated region
    $region26: #{tpu_custom_call.1} parent=1 // pred_check
      _
    $region27: #{tpu_custom_call.1} parent=1 // pred_check_branch
      %64 = sbr.rel (0) target = $region29
    $region28: #{tpu_custom_call.1} parent=1 // pred_region
      %65 = dma.done [#allocation9], 4096
    $region29: #{tpu_custom_call.1} parent=1 // pred_fallthru
      _
    // Predicated region
    $region30: #{tpu_custom_call.1} parent=1 // pred_check
      _
    $region31: #{tpu_custom_call.1} parent=1 // pred_check_branch
      %67 = sbr.rel (0) target = $region33
    $region32: #{tpu_custom_call.1} parent=1 // pred_region
      %68 = dma.done [#allocation9], 4096
    $region33: #{tpu_custom_call.1} parent=1 // pred_fallthru
      _
    %s70 = sld [smem:[#allocation3]]
    %v71 = vld [vmem:[#allocation5] sm:$0xff]
    %v72 = vld [vmem:[#allocation5 + $0x8] sm:$0xff]
    %v73 = vld [vmem:[#allocation5 + $0x10] sm:$0xff]
    %v74 = vld [vmem:[#allocation5 + $0x18] sm:$0xff]
    %v75 = vpack.c.bf16 %v71, %v71
    %v76 = vpack.c.bf16 %v72, %v72
    %v77 = vpack.c.bf16 %v73, %v73
    %v78 = vpack.c.bf16 %v74, %v74
    %v79 = vld [vmem:[#allocation8] sm:$0xf]
    %v80 = vld [vmem:[#allocation8 + $0x4] sm:$0xf]
    %v81 = vld [vmem:[#allocation8 + $0x8] sm:$0xf]
    %v82 = vld [vmem:[#allocation8 + $0xc] sm:$0xf]
    %v83 = vld [vmem:[#allocation8 + $0x10] sm:$0xf]
    %v84 = vld [vmem:[#allocation8 + $0x14] sm:$0xf]
    %v85 = vld [vmem:[#allocation8 + $0x18] sm:$0xf]
    %v86 = vld [vmem:[#allocation8 + $0x1c] sm:$0xf]
    %v87 = vld [vmem:[#allocation8 + $0x20] sm:$0xf]
    %v88 = vld [vmem:[#allocation8 + $0x24] sm:$0xf]
    %v89 = vld [vmem:[#allocation8 + $0x28] sm:$0xf]
    %v90 = vld [vmem:[#allocation8 + $0x2c] sm:$0xf]
    %v91 = vld [vmem:[#allocation8 + $0x30] sm:$0xf]
    %v92 = vld [vmem:[#allocation8 + $0x34] sm:$0xf]
    %v93 = vld [vmem:[#allocation8 + $0x38] sm:$0xf]
    %v94 = vld [vmem:[#allocation8 + $0x3c] sm:$0xf]
    %v95 = vld [vmem:[#allocation8 + $0x40] sm:$0xf]
    %v96 = vld [vmem:[#allocation8 + $0x44] sm:$0xf]
    %v97 = vld [vmem:[#allocation8 + $0x48] sm:$0xf]
    %v98 = vld [vmem:[#allocation8 + $0x4c] sm:$0xf]
    %v99 = vld [vmem:[#allocation8 + $0x50] sm:$0xf]
    %v100 = vld [vmem:[#allocation8 + $0x54] sm:$0xf]
    %v101 = vld [vmem:[#allocation8 + $0x58] sm:$0xf]
    %v102 = vld [vmem:[#allocation8 + $0x5c] sm:$0xf]
    %v103 = vld [vmem:[#allocation8 + $0x60] sm:$0xf]
    %v104 = vld [vmem:[#allocation8 + $0x64] sm:$0xf]
    %v105 = vld [vmem:[#allocation8 + $0x68] sm:$0xf]
    %v106 = vld [vmem:[#allocation8 + $0x6c] sm:$0xf]
    %v107 = vld [vmem:[#allocation8 + $0x70] sm:$0xf]
    %v108 = vld [vmem:[#allocation8 + $0x74] sm:$0xf]
    %v109 = vld [vmem:[#allocation8 + $0x78] sm:$0xf]
    %v110 = vld [vmem:[#allocation8 + $0x7c] sm:$0xf]
    %v111 = vld [vmem:[#allocation8 + $0x80] sm:$0xf]
    %v112 = vld [vmem:[#allocation8 + $0x84] sm:$0xf]
    %v113 = vld [vmem:[#allocation8 + $0x88] sm:$0xf]
    %v114 = vld [vmem:[#allocation8 + $0x8c] sm:$0xf]
    %v115 = vld [vmem:[#allocation8 + $0x90] sm:$0xf]
    %v116 = vld [vmem:[#allocation8 + $0x94] sm:$0xf]
    %v117 = vld [vmem:[#allocation8 + $0x98] sm:$0xf]
    %v118 = vld [vmem:[#allocation8 + $0x9c] sm:$0xf]
    %v119 = vld [vmem:[#allocation8 + $0xa0] sm:$0xf]
    %v120 = vld [vmem:[#allocation8 + $0xa4] sm:$0xf]
    %v121 = vld [vmem:[#allocation8 + $0xa8] sm:$0xf]
    %v122 = vld [vmem:[#allocation8 + $0xac] sm:$0xf]
    %v123 = vld [vmem:[#allocation8 + $0xb0] sm:$0xf]
    %v124 = vld [vmem:[#allocation8 + $0xb4] sm:$0xf]
    %v125 = vld [vmem:[#allocation8 + $0xb8] sm:$0xf]
    %v126 = vld [vmem:[#allocation8 + $0xbc] sm:$0xf]
    %v127 = vld [vmem:[#allocation8 + $0xc0] sm:$0xf]
    %v128 = vld [vmem:[#allocation8 + $0xc4] sm:$0xf]
    %v129 = vld [vmem:[#allocation8 + $0xc8] sm:$0xf]
    %v130 = vld [vmem:[#allocation8 + $0xcc] sm:$0xf]
    %v131 = vld [vmem:[#allocation8 + $0xd0] sm:$0xf]
    %v132 = vld [vmem:[#allocation8 + $0xd4] sm:$0xf]
    %v133 = vld [vmem:[#allocation8 + $0xd8] sm:$0xf]
    %v134 = vld [vmem:[#allocation8 + $0xdc] sm:$0xf]
    %v135 = vld [vmem:[#allocation8 + $0xe0] sm:$0xf]
    %v136 = vld [vmem:[#allocation8 + $0xe4] sm:$0xf]
    %v137 = vld [vmem:[#allocation8 + $0xe8] sm:$0xf]
    %v138 = vld [vmem:[#allocation8 + $0xec] sm:$0xf]
    %v139 = vld [vmem:[#allocation8 + $0xf0] sm:$0xf]
    %v140 = vld [vmem:[#allocation8 + $0xf4] sm:$0xf]
    %v141 = vld [vmem:[#allocation8 + $0xf8] sm:$0xf]
    %v142 = vld [vmem:[#allocation8 + $0xfc] sm:$0xf]
    %v143 = vld [vmem:[%s4] sm:$0x1]
    %v145 = vlaneseq
    %v146 = vshrl.u32 %v145, 7
    %v147 = vsub.s32 0, %v146
    %v148 = vrot.slane %v143, %v147
    %v214 = vunpack.c.l.b16 %v79
    %v215 = vunpack.c.l.b16 %v80
    %v216 = vunpack.c.l.b16 %v81
    %v217 = vunpack.c.l.b16 %v82
    %v218 = vunpack.c.l.b16 %v83
    %v219 = vunpack.c.l.b16 %v84
    %v220 = vunpack.c.l.b16 %v85
    %v221 = vunpack.c.l.b16 %v86
    %v222 = vunpack.c.l.b16 %v87
    %v223 = vunpack.c.l.b16 %v88
    %v224 = vunpack.c.l.b16 %v89
    %v225 = vunpack.c.l.b16 %v90
    %v226 = vunpack.c.l.b16 %v91
    %v227 = vunpack.c.l.b16 %v92
    %v228 = vunpack.c.l.b16 %v93
    %v229 = vunpack.c.l.b16 %v94
    %v230 = vunpack.c.l.b16 %v95
    %v231 = vunpack.c.l.b16 %v96
    %v232 = vunpack.c.l.b16 %v97
    %v233 = vunpack.c.l.b16 %v98
    %v234 = vunpack.c.l.b16 %v99
    %v235 = vunpack.c.l.b16 %v100
    %v236 = vunpack.c.l.b16 %v101
    %v237 = vunpack.c.l.b16 %v102
    %v238 = vunpack.c.l.b16 %v103
    %v239 = vunpack.c.l.b16 %v104
    %v240 = vunpack.c.l.b16 %v105
    %v241 = vunpack.c.l.b16 %v106
    %v242 = vunpack.c.l.b16 %v107
    %v243 = vunpack.c.l.b16 %v108
    %v244 = vunpack.c.l.b16 %v109
    %v245 = vunpack.c.l.b16 %v110
    %v246 = vunpack.c.l.b16 %v111
    %v247 = vunpack.c.l.b16 %v112
    %v248 = vunpack.c.l.b16 %v113
    %v249 = vunpack.c.l.b16 %v114
    %v250 = vunpack.c.l.b16 %v115
    %v251 = vunpack.c.l.b16 %v116
    %v252 = vunpack.c.l.b16 %v117
    %v253 = vunpack.c.l.b16 %v118
    %v254 = vunpack.c.l.b16 %v119
    %v255 = vunpack.c.l.b16 %v120
    %v256 = vunpack.c.l.b16 %v121
    %v257 = vunpack.c.l.b16 %v122
    %v258 = vunpack.c.l.b16 %v123
    %v259 = vunpack.c.l.b16 %v124
    %v260 = vunpack.c.l.b16 %v125
    %v261 = vunpack.c.l.b16 %v126
    %v262 = vunpack.c.l.b16 %v127
    %v263 = vunpack.c.l.b16 %v128
    %v264 = vunpack.c.l.b16 %v129
    %v265 = vunpack.c.l.b16 %v130
    %v266 = vunpack.c.l.b16 %v131
    %v267 = vunpack.c.l.b16 %v132
    %v268 = vunpack.c.l.b16 %v133
    %v269 = vunpack.c.l.b16 %v134
    %v270 = vunpack.c.l.b16 %v135
    %v271 = vunpack.c.l.b16 %v136
    %v272 = vunpack.c.l.b16 %v137
    %v273 = vunpack.c.l.b16 %v138
    %v274 = vunpack.c.l.b16 %v139
    %v275 = vunpack.c.l.b16 %v140
    %v276 = vunpack.c.l.b16 %v141
    %v277 = vunpack.c.l.b16 %v142
    %v278 = vpack.c.b16 %v215, %v214
    %v279 = vpack.c.b16 %v217, %v216
    %v280 = vpack.c.b16 %v219, %v218
    %v281 = vpack.c.b16 %v221, %v220
    %v282 = vpack.c.b16 %v223, %v222
    %v283 = vpack.c.b16 %v225, %v224
    %v284 = vpack.c.b16 %v227, %v226
    %v285 = vpack.c.b16 %v229, %v228
    %v286 = vpack.c.b16 %v231, %v230
    %v287 = vpack.c.b16 %v233, %v232
    %v288 = vpack.c.b16 %v235, %v234
    %v289 = vpack.c.b16 %v237, %v236
    %v290 = vpack.c.b16 %v239, %v238
    %v291 = vpack.c.b16 %v241, %v240
    %v292 = vpack.c.b16 %v243, %v242
    %v293 = vpack.c.b16 %v245, %v244
    %v294 = vpack.c.b16 %v247, %v246
    %v295 = vpack.c.b16 %v249, %v248
    %v296 = vpack.c.b16 %v251, %v250
    %v297 = vpack.c.b16 %v253, %v252
    %v298 = vpack.c.b16 %v255, %v254
    %v299 = vpack.c.b16 %v257, %v256
    %v300 = vpack.c.b16 %v259, %v258
    %v301 = vpack.c.b16 %v261, %v260
    %v302 = vpack.c.b16 %v263, %v262
    %v303 = vpack.c.b16 %v265, %v264
    %v304 = vpack.c.b16 %v267, %v266
    %v305 = vpack.c.b16 %v269, %v268
    %v306 = vpack.c.b16 %v271, %v270
    %v307 = vpack.c.b16 %v273, %v272
    %v308 = vpack.c.b16 %v275, %v274
    %v309 = vpack.c.b16 %v277, %v276
    %342 = vmatprep.subr.bf16.mxu0 0
    %343 = vmatpush1.bf16.msra.mxu0 %v285
    %344 = vmatprep.subr.bf16.mxu0 0
    %345 = vmatpush1.bf16.msra.mxu0 %v284
    %346 = vmatprep.subr.bf16.mxu0 0
    %347 = vmatpush1.bf16.msra.mxu0 %v283
    %348 = vmatprep.subr.bf16.mxu0 0
    %349 = vmatpush1.bf16.msra.mxu0 %v282
    %350 = vmatprep.subr.bf16.mxu0 0
    %351 = vmatpush1.bf16.msra.mxu0 %v281
    %352 = vmatprep.subr.bf16.mxu0 0
    %353 = vmatpush1.bf16.msra.mxu0 %v280
    %354 = vmatprep.subr.bf16.mxu0 0
    %355 = vmatpush1.bf16.msra.mxu0 %v279
    %356 = vmatprep.subr.bf16.mxu0 0
    %357 = vmatpush1.bf16.msra.mxu0 %v278
    %358 = vmatprep.subr.bf16.mxu0 0
    %359 = vmatpush2.bf16.msra.mxu0 %v293
    %360 = vmatprep.subr.bf16.mxu0 0
    %361 = vmatpush2.bf16.msra.mxu0 %v292
    %362 = vmatprep.subr.bf16.mxu0 0
    %363 = vmatpush2.bf16.msra.mxu0 %v291
    %364 = vmatprep.subr.bf16.mxu0 0
    %365 = vmatpush2.bf16.msra.mxu0 %v290
    %366 = vmatprep.subr.bf16.mxu0 0
    %367 = vmatpush2.bf16.msra.mxu0 %v289
    %368 = vmatprep.subr.bf16.mxu0 0
    %369 = vmatpush2.bf16.msra.mxu0 %v288
    %370 = vmatprep.subr.bf16.mxu0 0
    %371 = vmatpush2.bf16.msra.mxu0 %v287
    %372 = vmatprep.subr.bf16.mxu0 0
    %373 = vmatpush2.bf16.msra.mxu0 %v286
    %374 = vmatprep.mubr.bf16.mxu0 %v76
    %375 = vmatmul.mubr.bf16.gmra.mxu0 %v75
    %v376 = vpop.f32.mrf.mxu0
    %v377 = vadd.f32 %v148, %v376
    %v378 = vpop.f32.mrf.mxu0
    %v379 = vpop.f32.mrf.mxu0
    %v380 = vpop.f32.mrf.mxu0
    %381 = vdwg.mxu0
    %382 = vmatprep.subr.bf16.mxu0 0
    %383 = vmatpush1.bf16.msra.mxu0 %v301
    %384 = vmatprep.subr.bf16.mxu0 0
    %385 = vmatpush1.bf16.msra.mxu0 %v300
    %386 = vmatprep.subr.bf16.mxu0 0
    %387 = vmatpush1.bf16.msra.mxu0 %v299
    %388 = vmatprep.subr.bf16.mxu0 0
    %389 = vmatpush1.bf16.msra.mxu0 %v298
    %390 = vmatprep.subr.bf16.mxu0 0
    %391 = vmatpush1.bf16.msra.mxu0 %v297
    %392 = vmatprep.subr.bf16.mxu0 0
    %393 = vmatpush1.bf16.msra.mxu0 %v296
    %394 = vmatprep.subr.bf16.mxu0 0
    %395 = vmatpush1.bf16.msra.mxu0 %v295
    %396 = vmatprep.subr.bf16.mxu0 0
    %397 = vmatpush1.bf16.msra.mxu0 %v294
    %398 = vmatprep.subr.bf16.mxu0 0
    %399 = vmatpush2.bf16.msra.mxu0 %v309
    %400 = vmatprep.subr.bf16.mxu0 0
    %401 = vmatpush2.bf16.msra.mxu0 %v308
    %402 = vmatprep.subr.bf16.mxu0 0
    %403 = vmatpush2.bf16.msra.mxu0 %v307
    %404 = vmatprep.subr.bf16.mxu0 0
    %405 = vmatpush2.bf16.msra.mxu0 %v306
    %406 = vmatprep.subr.bf16.mxu0 0
    %407 = vmatpush2.bf16.msra.mxu0 %v305
    %408 = vmatprep.subr.bf16.mxu0 0
    %409 = vmatpush2.bf16.msra.mxu0 %v304
    %410 = vmatprep.subr.bf16.mxu0 0
    %411 = vmatpush2.bf16.msra.mxu0 %v303
    %412 = vmatprep.subr.bf16.mxu0 0
    %413 = vmatpush2.bf16.msra.mxu0 %v302
    %414 = vmatprep.mubr.bf16.mxu0 %v78
    %415 = vmatmul.mubr.bf16.gmra.mxu0 %v77
    %v416 = vpop.f32.mrf.mxu0
    %v417 = vadd.f32 %v377, %v416
    %v418 = vpop.f32.mrf.mxu0
    %v419 = vpop.f32.mrf.mxu0
    %v420 = vpop.f32.mrf.mxu0
    %421 = vdwg.mxu0
    %s422 = smul.f32 %s70, 2.0
    %s423 = sld [smem:[#allocation4]]
    %s424 = smul.f32 %s422, %s423
    %s425 = sld [smem:[#allocation4 + $0x1]]
    %s426 = smul.f32 %s422, %s425
    %s427 = sld [smem:[#allocation4 + $0x2]]
    %s428 = smul.f32 %s422, %s427
    %s429 = sld [smem:[#allocation4 + $0x3]]
    %s430 = smul.f32 %s422, %s429
    %s431 = sld [smem:[#allocation4 + $0x4]]
    %s432 = smul.f32 %s422, %s431
    %s433 = sld [smem:[#allocation4 + $0x5]]
    %s434 = smul.f32 %s422, %s433
    %s435 = sld [smem:[#allocation4 + $0x6]]
    %s436 = smul.f32 %s422, %s435
    %s437 = sld [smem:[#allocation4 + $0x7]]
    %s438 = smul.f32 %s422, %s437
    %s439 = ssub.f32 0.0, %s70
    %s440 = smul.f32 %s439, %s423
    %s441 = smul.f32 %s440, %s423
    %s442 = smul.f32 %s439, %s425
    %s443 = smul.f32 %s442, %s425
    %s444 = smul.f32 %s439, %s427
    %s445 = smul.f32 %s444, %s427
    %s446 = smul.f32 %s439, %s429
    %s447 = smul.f32 %s446, %s429
    %s448 = smul.f32 %s439, %s431
    %s449 = smul.f32 %s448, %s431
    %s450 = smul.f32 %s439, %s433
    %s451 = smul.f32 %s450, %s433
    %s452 = smul.f32 %s439, %s435
    %s453 = smul.f32 %s452, %s435
    %s454 = smul.f32 %s439, %s437
    %s455 = smul.f32 %s454, %s437
    %v456 = vstv %s424
    %v457 = vmul.f32 %v456, %v417
    %v458 = vstv %s441
    %v459 = vadd.f32 %v457, %v458
    %v460 = vstv %s426
    %v461 = vmul.f32 %v460, %v417
    %v462 = vstv %s443
    %v463 = vadd.f32 %v461, %v462
    %v464 = vmax.f32 %v459, %v463
    %v465 = vstv %s428
    %v466 = vmul.f32 %v465, %v417
    %v467 = vstv %s445
    %v468 = vadd.f32 %v466, %v467
    %v469 = vmax.f32 %v464, %v468
    %v470 = vstv %s430
    %v471 = vmul.f32 %v470, %v417
    %v472 = vstv %s447
    %v473 = vadd.f32 %v471, %v472
    %v474 = vmax.f32 %v469, %v473
    %v475 = vstv %s432
    %v476 = vmul.f32 %v475, %v417
    %v477 = vstv %s449
    %v478 = vadd.f32 %v476, %v477
    %v479 = vmax.f32 %v474, %v478
    %v480 = vstv %s434
    %v481 = vmul.f32 %v480, %v417
    %v482 = vstv %s451
    %v483 = vadd.f32 %v481, %v482
    %v484 = vmax.f32 %v479, %v483
    %v485 = vstv %s436
    %v486 = vmul.f32 %v485, %v417
    %v487 = vstv %s453
    %v488 = vadd.f32 %v486, %v487
    %v489 = vmax.f32 %v484, %v488
    %v490 = vstv %s438
    %v491 = vmul.f32 %v490, %v417
    %v492 = vstv %s455
    %v493 = vadd.f32 %v491, %v492
    %v494 = vmax.f32 %v489, %v493
    %v495 = vsub.f32 %v459, %v494
    %v496 = vmul.f32 %v495, 1.442695
    %v497 = vpow.pop %v496
    %v498 = vstv %s423
    %v499 = vmul.f32 %v497, %v498
    %v500 = vadd.f32 %v499, 0.0
    %v501 = vadd.f32 %v497, 0.0
    %v502 = vsub.f32 %v463, %v494
    %v503 = vmul.f32 %v502, 1.442695
    %v504 = vpow.pop %v503
    %v505 = vstv %s425
    %v506 = vmul.f32 %v504, %v505
    %v507 = vadd.f32 %v500, %v506
    %v508 = vadd.f32 %v501, %v504
    %v509 = vsub.f32 %v468, %v494
    %v510 = vmul.f32 %v509, 1.442695
    %v511 = vpow.pop %v510
    %v512 = vstv %s427
    %v513 = vmul.f32 %v511, %v512
    %v514 = vadd.f32 %v507, %v513
    %v515 = vadd.f32 %v508, %v511
    %v516 = vsub.f32 %v473, %v494
    %v517 = vmul.f32 %v516, 1.442695
    %v518 = vpow.pop %v517
    %v519 = vstv %s429
    %v520 = vmul.f32 %v518, %v519
    %v521 = vadd.f32 %v514, %v520
    %v522 = vadd.f32 %v515, %v518
    %v523 = vsub.f32 %v478, %v494
    %v524 = vmul.f32 %v523, 1.442695
    %v525 = vpow.pop %v524
    %v526 = vstv %s431
    %v527 = vmul.f32 %v525, %v526
    %v528 = vadd.f32 %v521, %v527
    %v529 = vadd.f32 %v522, %v525
    %v530 = vsub.f32 %v483, %v494
    %v531 = vmul.f32 %v530, 1.442695
    %v532 = vpow.pop %v531
    %v533 = vstv %s433
    %v534 = vmul.f32 %v532, %v533
    %v535 = vadd.f32 %v528, %v534
    %v536 = vadd.f32 %v529, %v532
    %v537 = vsub.f32 %v488, %v494
    %v538 = vmul.f32 %v537, 1.442695
    %v539 = vpow.pop %v538
    %v540 = vstv %s435
    %v541 = vmul.f32 %v539, %v540
    %v542 = vadd.f32 %v535, %v541
    %v543 = vadd.f32 %v536, %v539
    %v544 = vsub.f32 %v493, %v494
    %v545 = vmul.f32 %v544, 1.442695
    %v546 = vpow.pop %v545
    %v547 = vstv %s437
    %v548 = vmul.f32 %v546, %v547
    %v549 = vadd.f32 %v542, %v548
    %v550 = vadd.f32 %v543, %v546
    %v551 = vrcp.pop %v550
    %v552 = vmul.f32 %v549, %v551
    %v553 = vpack.c.bf16 %v552, %v552
    %v554 = vld [vmem:[#allocation10] sm:$0xff]
    %v555 = vld [vmem:[#allocation10 + $0x8] sm:$0xff]
    %v556 = vld [vmem:[#allocation10 + $0x10] sm:$0xff]
    %v557 = vld [vmem:[#allocation10 + $0x18] sm:$0xff]
    %v558 = vld [vmem:[#allocation10 + $0x20] sm:$0xff]
    %v559 = vld [vmem:[#allocation10 + $0x28] sm:$0xff]
    %v560 = vld [vmem:[#allocation10 + $0x30] sm:$0xff]
    %v561 = vld [vmem:[#allocation10 + $0x38] sm:$0xff]
    %v562 = vld [vmem:[#allocation10 + $0x40] sm:$0xff]
    %v563 = vld [vmem:[#allocation10 + $0x48] sm:$0xff]
    %v564 = vld [vmem:[#allocation10 + $0x50] sm:$0xff]
    %v565 = vld [vmem:[#allocation10 + $0x58] sm:$0xff]
    %v566 = vld [vmem:[#allocation10 + $0x60] sm:$0xff]
    %v567 = vld [vmem:[#allocation10 + $0x68] sm:$0xff]
    %v568 = vld [vmem:[#allocation10 + $0x70] sm:$0xff]
    %v569 = vld [vmem:[#allocation10 + $0x78] sm:$0xff]
    %v570 = vld [vmem:[#allocation10 + $0x80] sm:$0xff]
    %v571 = vld [vmem:[#allocation10 + $0x88] sm:$0xff]
    %v572 = vld [vmem:[#allocation10 + $0x90] sm:$0xff]
    %v573 = vld [vmem:[#allocation10 + $0x98] sm:$0xff]
    %v574 = vld [vmem:[#allocation10 + $0xa0] sm:$0xff]
    %v575 = vld [vmem:[#allocation10 + $0xa8] sm:$0xff]
    %v576 = vld [vmem:[#allocation10 + $0xb0] sm:$0xff]
    %v577 = vld [vmem:[#allocation10 + $0xb8] sm:$0xff]
    %v578 = vld [vmem:[#allocation10 + $0xc0] sm:$0xff]
    %v579 = vld [vmem:[#allocation10 + $0xc8] sm:$0xff]
    %v580 = vld [vmem:[#allocation10 + $0xd0] sm:$0xff]
    %v581 = vld [vmem:[#allocation10 + $0xd8] sm:$0xff]
    %v582 = vld [vmem:[#allocation10 + $0xe0] sm:$0xff]
    %v583 = vld [vmem:[#allocation10 + $0xe8] sm:$0xff]
    %v584 = vld [vmem:[#allocation10 + $0xf0] sm:$0xff]
    %v585 = vld [vmem:[#allocation10 + $0xf8] sm:$0xff]
    %v586 = vld [vmem:[%s6] sm:$0xf]
    %v588 = vlaneseq
    %v589 = vshrl.u32 %v588, 7
    %v590 = vsub.s32 0, %v589
    %v591 = vrot.slane %v586, %v590
    %v592 = vlaneseq
    %v593 = vshrl.u32 %v592, 7
    %v594 = vsub.s32 1, %v593
    %v595 = vrot.slane %v586, %v594
    %v596 = vlaneseq
    %v597 = vshrl.u32 %v596, 7
    %v598 = vsub.s32 2, %v597
    %v599 = vrot.slane %v586, %v598
    %v600 = vlaneseq
    %v601 = vshrl.u32 %v600, 7
    %v602 = vsub.s32 3, %v601
    %v603 = vrot.slane %v586, %v602
    %v640 = vunpack.c.l.b16 %v554
    %v641 = vunpack.c.h.b16 %v554
    %v642 = vunpack.c.l.b16 %v555
    %v643 = vunpack.c.h.b16 %v555
    %v644 = vunpack.c.l.b16 %v556
    %v645 = vunpack.c.h.b16 %v556
    %v646 = vunpack.c.l.b16 %v557
    %v647 = vunpack.c.h.b16 %v557
    %v648 = vunpack.c.l.b16 %v558
    %v649 = vunpack.c.h.b16 %v558
    %v650 = vunpack.c.l.b16 %v559
    %v651 = vunpack.c.h.b16 %v559
    %v652 = vunpack.c.l.b16 %v560
    %v653 = vunpack.c.h.b16 %v560
    %v654 = vunpack.c.l.b16 %v561
    %v655 = vunpack.c.h.b16 %v561
    %v656 = vunpack.c.l.b16 %v562
    %v657 = vunpack.c.h.b16 %v562
    %v658 = vunpack.c.l.b16 %v563
    %v659 = vunpack.c.h.b16 %v563
    %v660 = vunpack.c.l.b16 %v564
    %v661 = vunpack.c.h.b16 %v564
    %v662 = vunpack.c.l.b16 %v565
    %v663 = vunpack.c.h.b16 %v565
    %v664 = vunpack.c.l.b16 %v566
    %v665 = vunpack.c.h.b16 %v566
    %v666 = vunpack.c.l.b16 %v567
    %v667 = vunpack.c.h.b16 %v567
    %v668 = vunpack.c.l.b16 %v568
    %v669 = vunpack.c.h.b16 %v568
    %v670 = vunpack.c.l.b16 %v569
    %v671 = vunpack.c.h.b16 %v569
    %v672 = vunpack.c.l.b16 %v570
    %v673 = vunpack.c.h.b16 %v570
    %v674 = vunpack.c.l.b16 %v571
    %v675 = vunpack.c.h.b16 %v571
    %v676 = vunpack.c.l.b16 %v572
    %v677 = vunpack.c.h.b16 %v572
    %v678 = vunpack.c.l.b16 %v573
    %v679 = vunpack.c.h.b16 %v573
    %v680 = vunpack.c.l.b16 %v574
    %v681 = vunpack.c.h.b16 %v574
    %v682 = vunpack.c.l.b16 %v575
    %v683 = vunpack.c.h.b16 %v575
    %v684 = vunpack.c.l.b16 %v576
    %v685 = vunpack.c.h.b16 %v576
    %v686 = vunpack.c.l.b16 %v577
    %v687 = vunpack.c.h.b16 %v577
    %v688 = vunpack.c.l.b16 %v578
    %v689 = vunpack.c.h.b16 %v578
    %v690 = vunpack.c.l.b16 %v579
    %v691 = vunpack.c.h.b16 %v579
    %v692 = vunpack.c.l.b16 %v580
    %v693 = vunpack.c.h.b16 %v580
    %v694 = vunpack.c.l.b16 %v581
    %v695 = vunpack.c.h.b16 %v581
    %v696 = vunpack.c.l.b16 %v582
    %v697 = vunpack.c.h.b16 %v582
    %v698 = vunpack.c.l.b16 %v583
    %v699 = vunpack.c.h.b16 %v583
    %v700 = vunpack.c.l.b16 %v584
    %v701 = vunpack.c.h.b16 %v584
    %v702 = vunpack.c.l.b16 %v585
    %v703 = vunpack.c.h.b16 %v585
    %v704 = vpack.c.b16 %v644, %v640
    %v705 = vpack.c.b16 %v645, %v641
    %v706 = vpack.c.b16 %v646, %v642
    %v707 = vpack.c.b16 %v647, %v643
    %v708 = vpack.c.b16 %v652, %v648
    %v709 = vpack.c.b16 %v653, %v649
    %v710 = vpack.c.b16 %v654, %v650
    %v711 = vpack.c.b16 %v655, %v651
    %v712 = vpack.c.b16 %v660, %v656
    %v713 = vpack.c.b16 %v661, %v657
    %v714 = vpack.c.b16 %v662, %v658
    %v715 = vpack.c.b16 %v663, %v659
    %v716 = vpack.c.b16 %v668, %v664
    %v717 = vpack.c.b16 %v669, %v665
    %v718 = vpack.c.b16 %v670, %v666
    %v719 = vpack.c.b16 %v671, %v667
    %v720 = vpack.c.b16 %v676, %v672
    %v721 = vpack.c.b16 %v677, %v673
    %v722 = vpack.c.b16 %v678, %v674
    %v723 = vpack.c.b16 %v679, %v675
    %v724 = vpack.c.b16 %v684, %v680
    %v725 = vpack.c.b16 %v685, %v681
    %v726 = vpack.c.b16 %v686, %v682
    %v727 = vpack.c.b16 %v687, %v683
    %v728 = vpack.c.b16 %v692, %v688
    %v729 = vpack.c.b16 %v693, %v689
    %v730 = vpack.c.b16 %v694, %v690
    %v731 = vpack.c.b16 %v695, %v691
    %v732 = vpack.c.b16 %v700, %v696
    %v733 = vpack.c.b16 %v701, %v697
    %v734 = vpack.c.b16 %v702, %v698
    %v735 = vpack.c.b16 %v703, %v699
    %768 = vmatprep.subr.bf16.mxu0 %v733
    %769 = vmatpush1.bf16.msra.mxu0 %v732
    %770 = vmatprep.subr.bf16.mxu0 %v729
    %771 = vmatpush1.bf16.msra.mxu0 %v728
    %772 = vmatprep.subr.bf16.mxu0 %v725
    %773 = vmatpush1.bf16.msra.mxu0 %v724
    %774 = vmatprep.subr.bf16.mxu0 %v721
    %775 = vmatpush1.bf16.msra.mxu0 %v720
    %776 = vmatprep.subr.bf16.mxu0 %v717
    %777 = vmatpush1.bf16.msra.mxu0 %v716
    %778 = vmatprep.subr.bf16.mxu0 %v713
    %779 = vmatpush1.bf16.msra.mxu0 %v712
    %780 = vmatprep.subr.bf16.mxu0 %v709
    %781 = vmatpush1.bf16.msra.mxu0 %v708
    %782 = vmatprep.subr.bf16.mxu0 %v705
    %783 = vmatpush1.bf16.msra.mxu0 %v704
    %784 = vmatprep.subr.bf16.mxu0 0
    %785 = vmatpush2.bf16.msra.mxu0 0
    %786 = vmatprep.subr.bf16.mxu0 0
    %787 = vmatpush2.bf16.msra.mxu0 0
    %788 = vmatprep.subr.bf16.mxu0 0
    %789 = vmatpush2.bf16.msra.mxu0 0
    %790 = vmatprep.subr.bf16.mxu0 0
    %791 = vmatpush2.bf16.msra.mxu0 0
    %792 = vmatprep.subr.bf16.mxu0 0
    %793 = vmatpush2.bf16.msra.mxu0 0
    %794 = vmatprep.subr.bf16.mxu0 0
    %795 = vmatpush2.bf16.msra.mxu0 0
    %796 = vmatprep.subr.bf16.mxu0 0
    %797 = vmatpush2.bf16.msra.mxu0 0
    %798 = vmatprep.subr.bf16.mxu0 0
    %799 = vmatpush2.bf16.msra.mxu0 0
    %800 = vmatprep.mubr.bf16.mxu0 0
    %801 = vmatmul.mubr.bf16.gmra.mxu0 %v553
    %v802 = vpop.f32.mrf.mxu0
    %v803 = vadd.f32 %v591, %v802
    %v804 = vpop.f32.mrf.mxu0
    %v805 = vadd.f32 %v595, %v804
    %v806 = vpop.f32.mrf.mxu0
    %v807 = vpop.f32.mrf.mxu0
    %808 = vdwg.mxu0
    %809 = vmatprep.subr.bf16.mxu0 %v735
    %810 = vmatpush1.bf16.msra.mxu0 %v734
    %811 = vmatprep.subr.bf16.mxu0 %v731
    %812 = vmatpush1.bf16.msra.mxu0 %v730
    %813 = vmatprep.subr.bf16.mxu0 %v727
    %814 = vmatpush1.bf16.msra.mxu0 %v726
    %815 = vmatprep.subr.bf16.mxu0 %v723
    %816 = vmatpush1.bf16.msra.mxu0 %v722
    %817 = vmatprep.subr.bf16.mxu0 %v719
    %818 = vmatpush1.bf16.msra.mxu0 %v718
    %819 = vmatprep.subr.bf16.mxu0 %v715
    %820 = vmatpush1.bf16.msra.mxu0 %v714
    %821 = vmatprep.subr.bf16.mxu0 %v711
    %822 = vmatpush1.bf16.msra.mxu0 %v710
    %823 = vmatprep.subr.bf16.mxu0 %v707
    %824 = vmatpush1.bf16.msra.mxu0 %v706
    %825 = vmatprep.subr.bf16.mxu0 0
    %826 = vmatpush2.bf16.msra.mxu0 0
    %827 = vmatprep.subr.bf16.mxu0 0
    %828 = vmatpush2.bf16.msra.mxu0 0
    %829 = vmatprep.subr.bf16.mxu0 0
    %830 = vmatpush2.bf16.msra.mxu0 0
    %831 = vmatprep.subr.bf16.mxu0 0
    %832 = vmatpush2.bf16.msra.mxu0 0
    %833 = vmatprep.subr.bf16.mxu0 0
    %834 = vmatpush2.bf16.msra.mxu0 0
    %835 = vmatprep.subr.bf16.mxu0 0
    %836 = vmatpush2.bf16.msra.mxu0 0
    %837 = vmatprep.subr.bf16.mxu0 0
    %838 = vmatpush2.bf16.msra.mxu0 0
    %839 = vmatprep.subr.bf16.mxu0 0
    %840 = vmatpush2.bf16.msra.mxu0 0
    %841 = vmatprep.mubr.bf16.mxu0 0
    %842 = vmatmul.mubr.bf16.gmra.mxu0 %v553
    %v843 = vpop.f32.mrf.mxu0
    %v844 = vadd.f32 %v599, %v843
    %v845 = vpop.f32.mrf.mxu0
    %v846 = vadd.f32 %v603, %v845
    %v847 = vpop.f32.mrf.mxu0
    %v848 = vpop.f32.mrf.mxu0
    %849 = vdwg.mxu0
    %v850 = vxor.u32 %v803, 2147483648
    %v851 = vxor.u32 %v805, 2147483648
    %v852 = vxor.u32 %v844, 2147483648
    %v853 = vxor.u32 %v846, 2147483648
    %v854 = vmul.f32 %v850, 1.442695
    %v855 = vpow.pop %v854
    %v856 = vmul.f32 %v851, 1.442695
    %v857 = vpow.pop %v856
    %v858 = vmul.f32 %v852, 1.442695
    %v859 = vpow.pop %v858
    %v860 = vmul.f32 %v853, 1.442695
    %v861 = vpow.pop %v860
    %v862 = vadd.f32 %v855, 1.0
    %v863 = vadd.f32 %v857, 1.0
    %v864 = vadd.f32 %v859, 1.0
    %v865 = vadd.f32 %v861, 1.0
    %v866 = vrcp.pop %v862
    %v867 = vmul.f32 1.0, %v866
    %v868 = vrcp.pop %v863
    %v869 = vmul.f32 1.0, %v868
    %v870 = vrcp.pop %v864
    %v871 = vmul.f32 1.0, %v870
    %v872 = vrcp.pop %v865
    %v873 = vmul.f32 1.0, %v872
    %874 = vst [vmem:[#allocation11] sm:$0xff] %v867
    %875 = vst [vmem:[#allocation11 + $0x8] sm:$0xff] %v869
    %876 = vst [vmem:[#allocation11 + $0x10] sm:$0xff] %v871
    %877 = vst [vmem:[#allocation11 + $0x18] sm:$0xff] %v873
    // Predicated region
    $region34: #{tpu_custom_call.1} parent=1 // pred_check
      _
    $region35: #{tpu_custom_call.1} parent=1 // pred_check_branch
      %879 = sbr.rel (0) target = $region37
    $region36: #{tpu_custom_call.1} parent=1 // pred_region
      %s881 = ssub.s32 512, 512
      %882 = vsyncadd [#allocation7], %s881
      %s884 = sshll.u32 [#allocation11], 4
      %s885 = int_to_ptr.vmem [resolvable:$true] %s884
      %887 = dma.vmem_to_hbm [thread:$0]  %s885, 512, %s7, [#allocation7]
    $region37: #{tpu_custom_call.1} parent=1 // pred_fallthru
      _
    // Predicated region
    $region38: #{tpu_custom_call.1} parent=1 // pred_check
      _
    $region39: #{tpu_custom_call.1} parent=1 // pred_check_branch
      %889 = sbr.rel (0) target = $region41
    $region40: #{tpu_custom_call.1} parent=1 // pred_region
      %890 = dma.done [#allocation7], 512
    $region41: #{tpu_custom_call.1} parent=1 // pred_fallthru
      _
    %891 = vsyncpa [#allocation6], 1
    %892 = vsyncpa [#allocation9], 1
    %893 = vsyncpa [#allocation7], 1

</llo_original>
